<compile_context>
chip_gen: v6e
topology: v6e:2x2x1
jax: 0.10.0
libtpu: 0.0.40
codegen_flags: <defaults>
</compile_context>

<pallas_src>
import functools

import jax
import jax.numpy as jnp
from jax.experimental import pallas as pl
from jax.experimental.pallas import tpu as pltpu


def _instance_norm_kernel(x_ref, gamma_ref, beta_ref, o_ref, *, eps, inv_d):
    """x_ref: (1, TBt, CF).  Each t-row is normalized over its CF lane axis."""
    x = x_ref[...].astype(jnp.float32)
    mean = jnp.sum(x, axis=-1, keepdims=True) * inv_d               # (1, TBt, 1)
    var = jnp.sum(jnp.square(x - mean), axis=-1, keepdims=True) * inv_d
    inv_std = jax.lax.rsqrt(var + eps)       # EUP rsqrt: no per-element divide
    # (x - mean) is recomputed here instead of being kept live across the var
    # reduction, so only `x` is a full-block temporary (gamma/beta are already
    # f32 from the wrapper).
    o_ref[...] = ((x - mean) * inv_std * gamma_ref[...] + beta_ref[...]).astype(
        o_ref.dtype
    )


def _vmem_capacity_bytes():
    """Physical per-core VMEM; conservative fallback if the query is unavailable."""
    try:
        cap = getattr(pltpu.get_tpu_info(), "vmem_capacity_bytes", None)
        if cap:
            return int(cap)
    except Exception:
        pass
    return 64 * 1024 * 1024  # v7x physical size — safe lower bound everywhere


def _pick_tile_t(T, CF, itemsize, block_budget_bytes, batch):
    """Largest T-tile (multiple of 8, or full T) whose live VMEM footprint
    (double-buffered in+out blocks + f32 body temporaries) fits the budget,
    keeping >= 2 grid steps when possible (v7x megacore balance)."""
    lane_cf = ((CF + 127) // 128) * 128        # VMEM lane padding of the minor dim
    # 2x double-buffered input + 2x output blocks (io dtype) + ~2 f32 temps.
    bytes_per_row = lane_cf * (4 * itemsize + 2 * 4)
    max_rows = max(8, int(block_budget_bytes // bytes_per_row))

    limit = min(T, max_rows)
    tbt = None
    tb = (limit // 8) * 8
    while tb >= 8:                             # biggest multiple-of-8 divisor of T
        if T % tb == 0:
            tbt = tb
            break
        tb -= 8
    if tbt is None:
        if T <= max_rows:
            tbt = T                            # full-dim block (always legal), budget-checked
        else:
            tbt = max(8, (limit // 8) * 8)     # uneven T: masked final block

    # Ensure at least two grid steps so both v7x TensorCores get work.
    if batch * (-(-T // tbt)) < 2:
        half = (min(tbt, T // 2) // 8) * 8
        while half >= 8:
            if T % half == 0:
                tbt = half
                break
            half -= 8
    return tbt


def instance_norm(x, gamma, beta, eps):
    """x: (B, C, T, F); gamma, beta: (C*F,). Returns (B, C, T, F)."""
    B, C, T, F = x.shape
    CF = C * F
    assert gamma.shape == (CF,) and beta.shape == (CF,)

    # Lane-dense view: exactly the permute(0,2,1,3).flatten(-2) of the module.
    # TODO(synk): the input/output transposes run as XLA ops; fusing them into
    # the kernel (NCHW blocks + in-kernel relayout) would save two HBM passes.
    xr = jnp.transpose(x, (0, 2, 1, 3)).reshape(B, T, CF)
    g3 = gamma.astype(jnp.float32).reshape(1, 1, CF)
    b3 = beta.astype(jnp.float32).reshape(1, 1, CF)

    cap = _vmem_capacity_bytes()
    vmem_limit = int(min((cap * 3) // 4, 96 * 1024 * 1024))  # ~48 MiB v7x, 96 MiB v5e/v6e
    block_budget = vmem_limit // 2
    tbt = _pick_tile_t(T, CF, jnp.dtype(x.dtype).itemsize, block_budget, B)
    grid = (B, pl.cdiv(T, tbt))

    kernel = functools.partial(
        _instance_norm_kernel, eps=float(eps), inv_d=1.0 / float(CF)
    )

    yr = pl.pallas_call(
        kernel,
        out_shape=jax.ShapeDtypeStruct((B, T, CF), x.dtype),
        grid=grid,
        in_specs=[
            pl.BlockSpec((1, tbt, CF), lambda b, t: (b, t, 0)),
            pl.BlockSpec((1, 1, CF), lambda b, t: (0, 0, 0)),
            pl.BlockSpec((1, 1, CF), lambda b, t: (0, 0, 0)),
        ],
        out_specs=pl.BlockSpec((1, tbt, CF), lambda b, t: (b, t, 0)),
        compiler_params=pltpu.CompilerParams(
            dimension_semantics=("parallel", "parallel"),
            vmem_limit_bytes=vmem_limit,
        ),
    )(xr, g3, b3)

    return jnp.transpose(yr.reshape(B, T, C, F), (0, 2, 1, 3))


def reference_instance_norm(x, gamma, beta, eps):
    """Faithful translation of the PyTorch forward (permute + flatten path)."""
    B, C, T, F = x.shape
    xr = jnp.transpose(x, (0, 2, 1, 3)).reshape(B, T, C * F)
    mean = jnp.mean(xr, axis=-1, keepdims=True)
    var = jnp.mean(jnp.square(xr - mean), axis=-1, keepdims=True)
    y = (xr - mean) / jnp.sqrt(var + eps)
    y = y * gamma + beta
    return jnp.transpose(y.reshape(B, T, C, F), (0, 2, 1, 3))


if __name__ == "__main__":
    B, C, T, F = 2, 4, 16, 16
    feats = C * F  # the PyTorch module expects feats == C*F

    eps = float(jnp.finfo(jnp.float32).eps)  # matches torch.finfo(torch.float32).eps

    key = jax.random.PRNGKey(0)
    kx, kg, kb = jax.random.split(key, 3)
    x = jax.random.normal(kx, (B, C, T, F), dtype=jnp.float32)
    # Non-trivial gamma/beta so the C*F flatten ordering is actually exercised
    # (the module initializes both to ones; these values are only for testing).
    gamma = 1.0 + 0.1 * jax.random.normal(kg, (feats,), dtype=jnp.float32)
    beta = 0.1 * jax.random.normal(kb, (feats,), dtype=jnp.float32)

    out = jax.block_until_ready(instance_norm(x, gamma, beta, eps))
    ref = reference_instance_norm(x, gamma, beta, eps)

    assert out.shape == (B, C, T, F)
    assert jnp.allclose(out, ref, atol=2e-5, rtol=2e-5)

    print("KERNEL_OK")
</pallas_src>

<mosaic_0001>
module attributes {stable_mosaic.version = 11 : i64} {
  func.func @_instance_norm_kernel(%arg0: i32, %arg1: i32, %arg2: memref<1x16x64xf32, #tpu.memory_space<vmem>>, %arg3: memref<1x1x64xf32, #tpu.memory_space<vmem>>, %arg4: memref<1x1x64xf32, #tpu.memory_space<vmem>>, %arg5: memref<1x16x64xf32, #tpu.memory_space<vmem>>) attributes {dimension_semantics = [#tpu.dimension_semantics<parallel>, #tpu.dimension_semantics<parallel>], iteration_bounds = array<i64: 2, 1>, scalar_prefetch = 0 : i64, scratch_operands = 0 : i64, tpu.core_type = #tpu.core_type<tc>, window_params = [{transform_indices = @transform_0, window_bounds = array<i64: 1, 16, 64>}, {pipeline_mode = #tpu.pipeline_mode<synchronous>, transform_indices = @transform_1, window_bounds = array<i64: 1, 1, 64>}, {pipeline_mode = #tpu.pipeline_mode<synchronous>, transform_indices = @transform_2, window_bounds = array<i64: 1, 1, 64>}, {transform_indices = @transform_3, window_bounds = array<i64: 1, 16, 64>}]} {
    %c0 = arith.constant 0 : index
    %c0_0 = arith.constant 0 : index
    %c0_1 = arith.constant 0 : index
    %0 = vector.load %arg2[%c0, %c0_0, %c0_1] : memref<1x16x64xf32, #tpu.memory_space<vmem>>, vector<1x16x64xf32>
    %cst = arith.constant dense<0.000000e+00> : vector<1x16xf32>
    %1 = vector.multi_reduction <add>, %0, %cst [2] : vector<1x16x64xf32> to vector<1x16xf32>
    %2 = vector.shape_cast %1 : vector<1x16xf32> to vector<1x16x1xf32>
    %cst_2 = arith.constant 1.562500e-02 : f32
    %3 = vector.broadcast %cst_2 : f32 to vector<1x16x1xf32>
    %4 = arith.mulf %2, %3 : vector<1x16x1xf32>
    %5 = vector.broadcast %4 : vector<1x16x1xf32> to vector<1x16x64xf32>
    %6 = arith.subf %0, %5 : vector<1x16x64xf32>
    %7 = arith.mulf %6, %6 : vector<1x16x64xf32>
    %cst_3 = arith.constant dense<0.000000e+00> : vector<1x16xf32>
    %8 = vector.multi_reduction <add>, %7, %cst_3 [2] : vector<1x16x64xf32> to vector<1x16xf32>
    %9 = vector.shape_cast %8 : vector<1x16xf32> to vector<1x16x1xf32>
    %cst_4 = arith.constant 1.562500e-02 : f32
    %10 = vector.broadcast %cst_4 : f32 to vector<1x16x1xf32>
    %11 = arith.mulf %9, %10 : vector<1x16x1xf32>
    %cst_5 = arith.constant 1.1920929E-7 : f32
    %12 = vector.broadcast %cst_5 : f32 to vector<1x16x1xf32>
    %13 = arith.addf %11, %12 : vector<1x16x1xf32>
    %14 = math.rsqrt %13 : vector<1x16x1xf32>
    %15 = vector.broadcast %4 : vector<1x16x1xf32> to vector<1x16x64xf32>
    %16 = arith.subf %0, %15 : vector<1x16x64xf32>
    %17 = vector.broadcast %14 : vector<1x16x1xf32> to vector<1x16x64xf32>
    %18 = arith.mulf %16, %17 : vector<1x16x64xf32>
    %c0_6 = arith.constant 0 : index
    %c0_7 = arith.constant 0 : index
    %c0_8 = arith.constant 0 : index
    %19 = vector.load %arg3[%c0_6, %c0_7, %c0_8] : memref<1x1x64xf32, #tpu.memory_space<vmem>>, vector<1x1x64xf32>
    %20 = vector.broadcast %19 : vector<1x1x64xf32> to vector<1x16x64xf32>
    %21 = arith.mulf %18, %20 : vector<1x16x64xf32>
    %c0_9 = arith.constant 0 : index
    %c0_10 = arith.constant 0 : index
    %c0_11 = arith.constant 0 : index
    %22 = vector.load %arg4[%c0_9, %c0_10, %c0_11] : memref<1x1x64xf32, #tpu.memory_space<vmem>>, vector<1x1x64xf32>
    %23 = vector.broadcast %22 : vector<1x1x64xf32> to vector<1x16x64xf32>
    %24 = arith.addf %21, %23 : vector<1x16x64xf32>
    %c0_12 = arith.constant 0 : index
    %c0_13 = arith.constant 0 : index
    %c0_14 = arith.constant 0 : index
    %25 = vector.load %arg5[%c0_12, %c0_13, %c0_14] : memref<1x16x64xf32, #tpu.memory_space<vmem>>, vector<1x16x64xf32>
    tpu.vector_store %arg5[%c0_12, %c0_13, %c0_14], %24 {strides = array<i32>} : memref<1x16x64xf32, #tpu.memory_space<vmem>>, vector<1x16x64xf32>,
    return
  }
  func.func @transform_0(%arg0: i32, %arg1: i32) -> (i32, i32, i32) {
    %c0_i32 = arith.constant 0 : i32
    %c0_i32_0 = arith.constant 0 : i32
    return %arg0, %arg1, %c0_i32 : i32, i32, i32
  }
  func.func @transform_1(%arg0: i32, %arg1: i32) -> (i32, i32, i32) {
    %c0_i32 = arith.constant 0 : i32
    %c0_i32_0 = arith.constant 0 : i32
    %c0_i32_1 = arith.constant 0 : i32
    %c0_i32_2 = arith.constant 0 : i32
    return %c0_i32, %c0_i32_0, %c0_i32_1 : i32, i32, i32
  }
  func.func @transform_2(%arg0: i32, %arg1: i32) -> (i32, i32, i32) {
    %c0_i32 = arith.constant 0 : i32
    %c0_i32_0 = arith.constant 0 : i32
    %c0_i32_1 = arith.constant 0 : i32
    %c0_i32_2 = arith.constant 0 : i32
    return %c0_i32, %c0_i32_0, %c0_i32_1 : i32, i32, i32
  }
  func.func @transform_3(%arg0: i32, %arg1: i32) -> (i32, i32, i32) {
    %c0_i32 = arith.constant 0 : i32
    %c0_i32_0 = arith.constant 0 : i32
    return %arg0, %arg1, %c0_i32 : i32, i32, i32
  }
}

</mosaic_0001>

<llo_original>
// kernel: tpu_custom_call.1
$region0: #{tpu_custom_call.1}
  #allocation0 [shape = 'u32[]', space=smem, size = 0x4, offset = 0x4, fixed_abs, tag = 'smem constant byte address 0x4 - core index']
  #allocation1 [shape = 'u32[144,128]{1,0:T(1,128)}', space=vmem, size = 0x12000, scoped, tag = 'internal scratch']
  %s0 = inlined_call_operand.hbm [shape: f32[2,16,64], index: 0, kind: input, shape index: {}]
  %s1 = inlined_call_operand.vmem [shape: f32[1,1,64], index: 1, kind: input, shape index: {}]
  %s2 = inlined_call_operand.vmem [shape: f32[1,1,64], index: 2, kind: input, shape index: {}]
  %s3 = inlined_call_operand.hbm [shape: f32[2,16,64], index: 3, kind: output, shape index: {}]
  %s4 = sld [smem:[#allocation0]]
  $region49: #{tpu_custom_call.1} parent=0
    _
  %s6 = ssub.s32 1, %s4
  %s7 = scalar_select 0, %s6, %s4
  $region1: #{tpu_custom_call.1} parent=0
    #allocation2 [shape = 'u8[16384]{0}', space=vmem, size = 0x4000, scoped, tag = 'input window, operand 0']
    #allocation3 [shape = 's32[2]{0}', space=sflag, size = 0x8, scoped, tag = 'scoped memory for tpu_custom_call.1']
    #allocation4 [shape = 's32[2]{0}', space=sflag, size = 0x8, scoped, tag = 'scoped memory for tpu_custom_call.1']
    #allocation5 [shape = 'u8[16384]{0}', space=vmem, size = 0x4000, scoped, tag = 'output window, operand 0']
    %8 = vsyncpa [#allocation3], 0
    %s9 = scalar_lea.sflag [#allocation3], 1
    %10 = vsyncpa %s9, 0
    %11 = vsyncpa [#allocation4], 0
    %s12 = scalar_lea.sflag [#allocation4], 1
    %13 = vsyncpa %s12, 0
    loop: start=0, step=1, limit=4
    $region2: #{tpu_custom_call.1} parent=1 // loop_pre_header
      _
    $region3: #{tpu_custom_call.1} parent=1 // loop_header
      %s15 = sphi 0, %s19
      %p16 = scmp.ge.s32.totalorder %s15, 4
      %s22 = sphi 0, %s34
      %s23 = sphi 0, %s30
      %s24 = sphi 0, %s22
      %s25 = sphi 0, %s23
      %s26 = sphi 0, %s24
      %s27 = sphi 0, %s25
      %s39 = sphi 0, %s41
      %s42 = sphi 0, %s39
      %s43 = sphi 0, %s42
      %s59 = sphi 0, %s43
      %s63 = sphi 0, %s63
      %s65 = sphi 0, %s63
      %s66 = sphi 0, %s65
      %s80 = sphi 0, %s66
      %s84 = sphi 0, %s84
      %s86 = sphi 0, %s84
      %s87 = sphi 0, %s86
      %s101 = sphi 0, %s87
      %s109 = sphi 0, %s111
      %s112 = sphi 0, %s109
      %s113 = sphi 0, %s112
      %s129 = sphi 0, %s113
    $region4: #{tpu_custom_call.1} parent=1 // loop_header_branch
      %18 = sbr.rel (%p16) target = $region8
    $region5: #{tpu_custom_call.1} parent=1 // loop_body
      %s20 = ssub.s32 %s15, 1
      %s21 = ssub.s32 %s15, 2
      %s28 = sadd.s32 1, %s23
      %p29 = scmp.ge.s32.totalorder %s28, 1
      %s30 = scalar_select %p29, 0, %s28
      %s31 = sadd.s32 1, %s22
      %s32 = scalar_select %p29, %s31, %s22
      %p33 = scmp.ge.s32.totalorder %s32, 2
      %s34 = scalar_select %p33, 0, %s32
      %s35 = ssub.s32 %s22, %s34
      %s36 = ssub.s32 %s23, %s30
      %s37 = sor.u32 %s35, %s36
      %p38 = scmp.eq.s32.totalorder %s37, 0
      %s40 = sadd.s32 %s39, 1
      %s41 = scalar_select %p38, %s39, %s40
      %p44 = pneg %p38
      %p45 = scmp.eq.s32.totalorder %s15, 1
      %p46 = por %p44, %p45
      %p47 = scmp.ne.s32.totalorder %s39, %s42
      %p48 = scmp.eq.s32.totalorder %s15, 0
      %p49 = por %p47, %p48
      %p50 = scmp.ne.s32.totalorder %s39, %s42
      %p51 = scmp.eq.s32.totalorder %s20, 1
      %p52 = por %p50, %p51
      %p53 = scmp.ne.s32.totalorder %s42, %s43
      %p54 = scmp.eq.s32.totalorder %s20, 0
      %p55 = por %p53, %p54
      %p56 = scmp.ne.s32.totalorder %s42, %s43
      %p57 = scmp.eq.s32.totalorder %s21, 1
      %p58 = por %p56, %p57
      %p60 = scmp.ne.s32.totalorder %s43, %s59
      %p61 = scmp.eq.s32.totalorder %s21, 0
      %p62 = por %p60, %p61
      %s64 = sadd.s32 %s63, 1
      %p67 = scmp.eq.s32.totalorder %s15, 1
      %p68 = scmp.ne.s32.totalorder %s63, %s65
      %p69 = scmp.eq.s32.totalorder %s15, 0
      %p70 = por %p68, %p69
      %p71 = scmp.ne.s32.totalorder %s63, %s65
      %p72 = scmp.eq.s32.totalorder %s20, 1
      %p73 = por %p71, %p72
      %p74 = scmp.ne.s32.totalorder %s65, %s66
      %p75 = scmp.eq.s32.totalorder %s20, 0
      %p76 = por %p74, %p75
      %p77 = scmp.ne.s32.totalorder %s65, %s66
      %p78 = scmp.eq.s32.totalorder %s21, 1
      %p79 = por %p77, %p78
      %p81 = scmp.ne.s32.totalorder %s66, %s80
      %p82 = scmp.eq.s32.totalorder %s21, 0
      %p83 = por %p81, %p82
      %s85 = sadd.s32 %s84, 1
      %p88 = scmp.eq.s32.totalorder %s15, 1
      %p89 = scmp.ne.s32.totalorder %s84, %s86
      %p90 = scmp.eq.s32.totalorder %s15, 0
      %p91 = por %p89, %p90
      %p92 = scmp.ne.s32.totalorder %s84, %s86
      %p93 = scmp.eq.s32.totalorder %s20, 1
      %p94 = por %p92, %p93
      %p95 = scmp.ne.s32.totalorder %s86, %s87
      %p96 = scmp.eq.s32.totalorder %s20, 0
      %p97 = por %p95, %p96
      %p98 = scmp.ne.s32.totalorder %s86, %s87
      %p99 = scmp.eq.s32.totalorder %s21, 1
      %p100 = por %p98, %p99
      %p102 = scmp.ne.s32.totalorder %s87, %s101
      %p103 = scmp.eq.s32.totalorder %s21, 0
      %p104 = por %p102, %p103
      %s105 = ssub.s32 %s22, %s34
      %s106 = ssub.s32 %s23, %s30
      %s107 = sor.u32 %s105, %s106
      %p108 = scmp.eq.s32.totalorder %s107, 0
      %s110 = sadd.s32 %s109, 1
      %s111 = scalar_select %p108, %s109, %s110
      %p114 = pneg %p108
      %p115 = scmp.eq.s32.totalorder %s15, 1
      %p116 = por %p114, %p115
      %p117 = scmp.ne.s32.totalorder %s109, %s112
      %p118 = scmp.eq.s32.totalorder %s15, 0
      %p119 = por %p117, %p118
      %p120 = scmp.ne.s32.totalorder %s109, %s112
      %p121 = scmp.eq.s32.totalorder %s20, 1
      %p122 = por %p120, %p121
      %p123 = scmp.ne.s32.totalorder %s112, %s113
      %p124 = scmp.eq.s32.totalorder %s20, 0
      %p125 = por %p123, %p124
      %p126 = scmp.ne.s32.totalorder %s112, %s113
      %p127 = scmp.eq.s32.totalorder %s21, 1
      %p128 = por %p126, %p127
      %p130 = scmp.ne.s32.totalorder %s113, %s129
      %p131 = scmp.eq.s32.totalorder %s21, 0
      %p132 = por %p130, %p131
      %p133 = scmp.le.s32.totalorder 1, %s15
      %p134 = scmp.lt.s32.totalorder %s15, 3
      %p135 = pnand %p133, %p134
      %p136 = pneg %p135
      // Predicated region
      $region9: #{tpu_custom_call.1} parent=5 // pred_check
        _
      $region10: #{tpu_custom_call.1} parent=5 // pred_check_branch
        %138 = sbr.rel (%p135) target = $region12
      $region11: #{tpu_custom_call.1} parent=5 // pred_region
        %s139 = ssub.s32 %s15, 1
        // Predicated region
        $region13: #{tpu_custom_call.1} parent=11 // pred_check
          %p140 = pneg %p76
        $region14: #{tpu_custom_call.1} parent=11 // pred_check_branch
          %142 = sbr.rel (%p140) target = $region16
        $region15: #{tpu_custom_call.1} parent=11 // pred_region
          _
        $region16: #{tpu_custom_call.1} parent=11 // pred_fallthru
          _
        // Predicated region
        $region17: #{tpu_custom_call.1} parent=11 // pred_check
          %p143 = pneg %p97
        $region18: #{tpu_custom_call.1} parent=11 // pred_check_branch
          %145 = sbr.rel (%p143) target = $region20
        $region19: #{tpu_custom_call.1} parent=11 // pred_region
          _
        $region20: #{tpu_custom_call.1} parent=11 // pred_fallthru
          _
      $region12: #{tpu_custom_call.1} parent=5 // pred_fallthru
        _
      %p146 = scmp.lt.s32.totalorder %s15, 2
      // Predicated region
      $region21: #{tpu_custom_call.1} parent=5 // pred_check
        %p147 = pneg %p146
      $region22: #{tpu_custom_call.1} parent=5 // pred_check_branch
        %149 = sbr.rel (%p147) target = $region24
      $region23: #{tpu_custom_call.1} parent=5 // pred_region
        // Predicated region
        $region25: #{tpu_custom_call.1} parent=23 // pred_check
          %p150 = pneg %p49
        $region26: #{tpu_custom_call.1} parent=23 // pred_check_branch
          %152 = sbr.rel (%p150) target = $region28
        $region27: #{tpu_custom_call.1} parent=23 // pred_region
          %s153 = sand.u32 %s39, 1
          %s154 = scalar_lea.sflag [#allocation3], %s153
          %s155 = sand.u32 %s39, 1
          %s156 = smul.addr %s155, 16
          %s157 = scalar_lea.vmem [#allocation2], %s156
          %s158 = smul.u32 2, %s23
          %s160 = ssub.s32 256, 256
          %161 = vsyncadd %s154, %s160
          %s162 = smul.addr %s22, 2
          %s163 = sadd.s32 %s158, %s162
          %s164 = smul.addr %s163, 128
          %s165 = scalar_lea.hbm %s0, %s164
          %s166 = sshll.u32 %s157, 4
          %s167 = int_to_ptr.vmem [resolvable:$true] %s166
          %172 = dma.hbm_to_vmem [thread:$0]  %s165, 256, %s167, %s154, 128, 128, 8
        $region28: #{tpu_custom_call.1} parent=23 // pred_fallthru
          _
      $region24: #{tpu_custom_call.1} parent=5 // pred_fallthru
        _
      %p173 = scmp.le.s32.totalorder 1, %s15
      %p174 = scmp.lt.s32.totalorder %s15, 3
      %p175 = pnand %p173, %p174
      %p176 = pneg %p175
      // Predicated region
      $region29: #{tpu_custom_call.1} parent=5 // pred_check
        _
      $region30: #{tpu_custom_call.1} parent=5 // pred_check_branch
        %178 = sbr.rel (%p175) target = $region32
      $region31: #{tpu_custom_call.1} parent=5 // pred_region
        %s179 = ssub.s32 %s15, 1
        %s180 = sand.u32 %s42, 1
        %s181 = scalar_lea.sflag [#allocation3], %s180
        %s182 = sand.u32 %s42, 1
        %s183 = smul.addr %s182, 16
        %s184 = scalar_lea.vmem [#allocation2], %s183
        // Predicated region
        $region33: #{tpu_custom_call.1} parent=31 // pred_check
          %p185 = pneg %p55
        $region34: #{tpu_custom_call.1} parent=31 // pred_check_branch
          %187 = sbr.rel (%p185) target = $region36
        $region35: #{tpu_custom_call.1} parent=31 // pred_region
          %188 = dma.done %s181, 256
        $region36: #{tpu_custom_call.1} parent=31 // pred_fallthru
          _
        %s189 = sand.u32 %s42, 1
        %s190 = scalar_lea.sflag [#allocation3], %s189
        %s191 = sand.u32 %s42, 1
        %s192 = smul.addr %s191, 16
        %s193 = scalar_lea.vmem [#allocation2], %s192
        %p194 = pneg %p55
        %p195 = pneg %p52
        %p196 = pneg %p76
        %p197 = pneg %p73
        %p198 = pneg %p97
        %p199 = pneg %p94
        %p200 = pneg %p125
        %p201 = pneg %p122
        %s202 = sand.u32 %s112, 1
        %s203 = scalar_lea.sflag [#allocation4], %s202
        %s204 = sand.u32 %s112, 1
        %s205 = smul.addr %s204, 16
        %s206 = scalar_lea.vmem [#allocation5], %s205
        %s207 = smul.u32 2, %s25
        %s208 = smul.u32 2, %s25
        %v209 = vld [vmem:[%s184] sm:$0xff]
        %v210 = vld [vmem:[%s184 + $0x8] sm:$0xff]
        %vm211 = vcmask 523264
        %v212 = vsel %vm211, %v209, 0.0
        %213 = vadd.xlane.f32.xlu0 %v212
        %v214 = vpop.xlane.xlu0 %213
        %v215 = vsel %vm211, %v210, 0.0
        %216 = vadd.xlane.f32.xlu0 %v215
        %v217 = vpop.xlane.xlu0 %216
        %v218 = vmul.f32 %v214, 0.015625
        %v219 = vmul.f32 %v217, 0.015625
        %v220 = vsub.f32 %v209, %v218
        %v221 = vsub.f32 %v210, %v219
        %v222 = vmul.f32 %v220, %v220
        %v223 = vmul.f32 %v221, %v221
        %v224 = vsel %vm211, %v222, 0.0
        %225 = vadd.xlane.f32.xlu0 %v224
        %v226 = vpop.xlane.xlu0 %225
        %v227 = vsel %vm211, %v223, 0.0
        %228 = vadd.xlane.f32.xlu0 %v227
        %v229 = vpop.xlane.xlu0 %228
        %v230 = vmul.f32 %v226, 0.015625
        %v231 = vmul.f32 %v229, 0.015625
        %v232 = vadd.f32 %v230, 1.1920929e-07
        %v233 = vadd.f32 %v231, 1.1920929e-07
        %v234 = vrsqrt.pop %v232
        %v235 = vrsqrt.pop %v233
        %v236 = vmul.f32 %v220, %v234
        %v237 = vmul.f32 %v221, %v235
        %v238 = vld [vmem:[%s1] sm:$0x1]
        %v240 = vlaneseq
        %v241 = vshrl.u32 %v240, 7
        %v242 = vsub.s32 0, %v241
        %v243 = vrot.slane %v238, %v242
        %v245 = vmul.f32 %v236, %v243
        %v246 = vmul.f32 %v237, %v243
        %v247 = vld [vmem:[%s2] sm:$0x1]
        %v249 = vlaneseq
        %v250 = vshrl.u32 %v249, 7
        %v251 = vsub.s32 0, %v250
        %v252 = vrot.slane %v247, %v251
        %v254 = vadd.f32 %v245, %v252
        %v255 = vadd.f32 %v246, %v252
        %256 = vst.msk [vmem:[%s206] sm:$0xff] %vm211, %v254
        %257 = vst.msk [vmem:[%s206 + $0x8] sm:$0xff] %vm211, %v255
        %s258 = sand.u32 %s112, 1
        %s259 = scalar_lea.sflag [#allocation4], %s258
        %s260 = sand.u32 %s112, 1
        %s261 = smul.addr %s260, 16
        %s262 = scalar_lea.vmem [#allocation5], %s261
        // Predicated region
        $region37: #{tpu_custom_call.1} parent=31 // pred_check
          %p263 = pneg %p122
        $region38: #{tpu_custom_call.1} parent=31 // pred_check_branch
          %265 = sbr.rel (%p263) target = $region40
        $region39: #{tpu_custom_call.1} parent=31 // pred_region
          %s266 = smul.u32 2, %s25
          %s268 = ssub.s32 256, 256
          %269 = vsyncadd %s259, %s268
          %s270 = smul.addr %s24, 2
          %s271 = sadd.s32 %s266, %s270
          %s272 = smul.addr %s271, 128
          %s273 = scalar_lea.hbm %s3, %s272
          %s274 = sshll.u32 %s262, 4
          %s275 = int_to_ptr.vmem [resolvable:$true] %s274
          %280 = dma.vmem_to_hbm [thread:$0]  %s275, 256, %s273, %s259, 128, 128, 8
        $region40: #{tpu_custom_call.1} parent=31 // pred_fallthru
          _
      $region32: #{tpu_custom_call.1} parent=5 // pred_fallthru
        _
      %p281 = scmp.le.s32.totalorder 2, %s15
      // Predicated region
      $region41: #{tpu_custom_call.1} parent=5 // pred_check
        %p282 = pneg %p281
      $region42: #{tpu_custom_call.1} parent=5 // pred_check_branch
        %284 = sbr.rel (%p282) target = $region44
      $region43: #{tpu_custom_call.1} parent=5 // pred_region
        %s285 = ssub.s32 %s15, 2
        // Predicated region
        $region45: #{tpu_custom_call.1} parent=43 // pred_check
          %p286 = pneg %p128
        $region46: #{tpu_custom_call.1} parent=43 // pred_check_branch
          %288 = sbr.rel (%p286) target = $region48
        $region47: #{tpu_custom_call.1} parent=43 // pred_region
          %s289 = sand.u32 %s113, 1
          %s290 = scalar_lea.sflag [#allocation4], %s289
          %s291 = sand.u32 %s113, 1
          %s292 = smul.addr %s291, 16
          %s293 = scalar_lea.vmem [#allocation5], %s292
          %294 = dma.done %s290, 256
        $region48: #{tpu_custom_call.1} parent=43 // pred_fallthru
          _
      $region44: #{tpu_custom_call.1} parent=5 // pred_fallthru
        _
    $region6: #{tpu_custom_call.1} parent=1 // loop_footer
      %s19 = sadd.s32 1, %s15
    $region7: #{tpu_custom_call.1} parent=1 // loop_footer_branch
      %14 = sbr.rel target = $region3
    $region8: #{tpu_custom_call.1} parent=1 // loop_exit
      _
    %295 = vsyncpa [#allocation3], 1
    %s296 = scalar_lea.sflag [#allocation3], 1
    %297 = vsyncpa %s296, 1
    %298 = vsyncpa [#allocation4], 1
    %s299 = scalar_lea.sflag [#allocation4], 1
    %300 = vsyncpa %s299, 1

</llo_original>
